<compile_context>
chip_gen: v7x
topology: tpu7x:2x2x1
jax: 0.10.0
libtpu: 0.0.40
codegen_flags: <defaults>
</compile_context>

<pallas_src>
import functools

import jax
import jax.numpy as jnp
from jax.experimental import pallas as pl
from jax.experimental.pallas import tpu as pltpu

NUM_STATE = 115
HIDDEN = 64
NUM_ACTION = 19

# Max rows per batch tile.  8192 rows of f32 activations:
#   x tile  8192*115*4 ~= 3.77 MB, hidden 8192*64*4 = 2 MB, out 8192*19*4 ~= 0.62 MB
# -> ~10 MB with double-buffered x/out + resident weights: far inside the
#    32 MiB scoped VMEM default on every generation (v7x physical = 64 MiB).
MAX_BLOCK_B = 8192

# Above this batch we always use >= 2 grid steps so both v7x TensorCores get
# work (harmless single extra step on v5e/v6e).
MIN_B_FOR_TWO_TILES = 2048


def actor_kernel(x_ref, w1_ref, b1_ref, w2_ref, b2_ref, out_ref):
    # fc1 + ReLU
    x = x_ref[...]
    h = jnp.dot(x, w1_ref[...], preferred_element_type=jnp.float32) + b1_ref[...]
    h = jnp.maximum(h, 0.0)
    # action_head
    logits = jnp.dot(h, w2_ref[...], preferred_element_type=jnp.float32) + b2_ref[...]
    # softmax along dim=1 (last dim), numerically stabilized.
    m = jnp.max(logits, axis=-1, keepdims=True)
    e = jnp.exp(logits - m)
    denom = jnp.sum(e, axis=-1, keepdims=True)
    # Plain f32 divide: keeps exact 1e-5 parity; the VPU has plenty of slack in
    # this HBM-bound kernel, so there is nothing to gain from an approx vrcp.
    out_ref[...] = (e / denom).astype(out_ref.dtype)


def _round_up(n, m):
    return ((n + m - 1) // m) * m


def _ceil_div(a, b):
    return -(-a // b)


def _choose_tile(B, block_b):
    """Pick a batch tile size that evens out tiles and minimizes tail padding."""
    B = max(B, 1)
    n_tiles = _ceil_div(B, block_b)
    # v7x has 2 TensorCores: make sure a large batch is split across >= 2 steps.
    if B > MIN_B_FOR_TWO_TILES and n_tiles < 2:
        n_tiles = 2
    tb = _round_up(_ceil_div(B, n_tiles), 8)  # multiple of 8 (sublane rule)
    return tb


@functools.partial(jax.jit, static_argnames=("block_b",))
def actor_forward(x, w1, b1, w2, b2, *, block_b=MAX_BLOCK_B):
    B = x.shape[0]
    tb = _choose_tile(B, block_b)
    b_padded = _round_up(B, tb)
    if b_padded != B:
        # Zero-pad extra rows; their (well-defined) softmax outputs are sliced off.
        x = jnp.pad(x, ((0, b_padded - B), (0, 0)))
    grid = (b_padded // tb,)

    flops = 2 * b_padded * (NUM_STATE * HIDDEN + HIDDEN * NUM_ACTION)
    weight_bytes = 4 * (NUM_STATE * HIDDEN + HIDDEN + HIDDEN * NUM_ACTION + NUM_ACTION)
    bytes_accessed = b_padded * (NUM_STATE + NUM_ACTION) * 4 + weight_bytes

    out = pl.pallas_call(
        actor_kernel,
        out_shape=jax.ShapeDtypeStruct((b_padded, NUM_ACTION), jnp.float32),
        grid=grid,
        in_specs=[
            # x: batch-tiled, full feature width (satisfies the (8,128) rule since
            # 115 is the full last dim and tb is a multiple of 8).
            pl.BlockSpec((tb, NUM_STATE), lambda i: (i, 0)),
            # Parameters: full-array blocks, constant index_map -> VMEM-resident.
            pl.BlockSpec((NUM_STATE, HIDDEN), lambda i: (0, 0)),
            pl.BlockSpec((1, HIDDEN), lambda i: (0, 0)),
            pl.BlockSpec((HIDDEN, NUM_ACTION), lambda i: (0, 0)),
            pl.BlockSpec((1, NUM_ACTION), lambda i: (0, 0)),
        ],
        out_specs=pl.BlockSpec((tb, NUM_ACTION), lambda i: (i, 0)),
        compiler_params=pltpu.CompilerParams(
            dimension_semantics=("parallel",),  # megacore sharding on v7x
        ),
        cost_estimate=pl.CostEstimate(
            flops=flops,
            transcendentals=b_padded * NUM_ACTION,  # exp per logit
            bytes_accessed=bytes_accessed,
        ),
    )(x, w1, b1, w2, b2)

    if b_padded != B:
        out = out[:B]
    return out


def init_params(key):
    # Deterministic init mimicking PyTorch's default U(-1/sqrt(fan_in), 1/sqrt(fan_in)).
    k1, k2, k3, k4 = jax.random.split(key, 4)
    lim1 = 1.0 / jnp.sqrt(jnp.float32(NUM_STATE))
    lim2 = 1.0 / jnp.sqrt(jnp.float32(HIDDEN))
    w1 = jax.random.uniform(k1, (NUM_STATE, HIDDEN), jnp.float32, -lim1, lim1)
    b1 = jax.random.uniform(k2, (1, HIDDEN), jnp.float32, -lim1, lim1)
    w2 = jax.random.uniform(k3, (HIDDEN, NUM_ACTION), jnp.float32, -lim2, lim2)
    b2 = jax.random.uniform(k4, (1, NUM_ACTION), jnp.float32, -lim2, lim2)
    return w1, b1, w2, b2


def reference_forward(x, w1, b1, w2, b2):
    h = jnp.maximum(x @ w1 + b1, 0.0)
    logits = h @ w2 + b2
    return jax.nn.softmax(logits, axis=1)


if __name__ == "__main__":
    key = jax.random.PRNGKey(0)
    kx, kx2, kx3, kp = jax.random.split(key, 4)
    w1, b1, w2, b2 = init_params(kp)

    # Small batch (tile == batch, single grid step).
    B = 8
    x = jax.random.normal(kx, (B, NUM_STATE), jnp.float32)
    out = jax.block_until_ready(actor_forward(x, w1, b1, w2, b2))
    ref = reference_forward(x, w1, b1, w2, b2)
    assert out.shape == (B, NUM_ACTION)
    assert jnp.allclose(out, ref, atol=1e-5, rtol=1e-5)
    assert jnp.allclose(jnp.sum(out, axis=1), jnp.ones((B,)), atol=1e-5)

    # Non-multiple batch exercises the padding + multi-tile grid path
    # (block_b=16 -> three tiles of 16 rows, last tile padded).
    B2 = 37
    x2 = jax.random.normal(kx2, (B2, NUM_STATE), jnp.float32)
    out2 = jax.block_until_ready(actor_forward(x2, w1, b1, w2, b2, block_b=16))
    ref2 = reference_forward(x2, w1, b1, w2, b2)
    assert out2.shape == (B2, NUM_ACTION)
    assert jnp.allclose(out2, ref2, atol=1e-5, rtol=1e-5)
    assert jnp.allclose(jnp.sum(out2, axis=1), jnp.ones((B2,)), atol=1e-5)

    # Batch just above the two-tile threshold: forces >= 2 evenly-sized grid
    # steps (v7x dual-TC path) with minimal tail padding.
    B3 = 2056
    x3 = jax.random.normal(kx3, (B3, NUM_STATE), jnp.float32)
    out3 = jax.block_until_ready(actor_forward(x3, w1, b1, w2, b2))
    ref3 = reference_forward(x3, w1, b1, w2, b2)
    assert out3.shape == (B3, NUM_ACTION)
    assert jnp.allclose(out3, ref3, atol=1e-5, rtol=1e-5)
    assert jnp.allclose(jnp.sum(out3, axis=1), jnp.ones((B3,)), atol=1e-5)

    print("KERNEL_OK")
</pallas_src>

<mosaic_0001>
module attributes {stable_mosaic.version = 11 : i64} {
  func.func @actor_kernel(%arg0: i32, %arg1: memref<8x115xf32, #tpu.memory_space<vmem>>, %arg2: memref<115x64xf32, #tpu.memory_space<vmem>>, %arg3: memref<1x64xf32, #tpu.memory_space<vmem>>, %arg4: memref<64x19xf32, #tpu.memory_space<vmem>>, %arg5: memref<1x19xf32, #tpu.memory_space<vmem>>, %arg6: memref<8x19xf32, #tpu.memory_space<vmem>>) attributes {dimension_semantics = [#tpu.dimension_semantics<parallel>], iteration_bounds = array<i64: 1>, scalar_prefetch = 0 : i64, scratch_operands = 0 : i64, tpu.core_type = #tpu.core_type<tc>, window_params = [{transform_indices = @transform_0, window_bounds = array<i64: 8, 115>}, {pipeline_mode = #tpu.pipeline_mode<synchronous>, transform_indices = @transform_1, window_bounds = array<i64: 115, 64>}, {pipeline_mode = #tpu.pipeline_mode<synchronous>, transform_indices = @transform_2, window_bounds = array<i64: 1, 64>}, {pipeline_mode = #tpu.pipeline_mode<synchronous>, transform_indices = @transform_3, window_bounds = array<i64: 64, 19>}, {pipeline_mode = #tpu.pipeline_mode<synchronous>, transform_indices = @transform_4, window_bounds = array<i64: 1, 19>}, {transform_indices = @transform_5, window_bounds = array<i64: 8, 19>}]} {
    %c0 = arith.constant 0 : index
    %c0_0 = arith.constant 0 : index
    %0 = vector.load %arg1[%c0, %c0_0] : memref<8x115xf32, #tpu.memory_space<vmem>>, vector<8x115xf32>
    %c0_1 = arith.constant 0 : index
    %c0_2 = arith.constant 0 : index
    %1 = vector.load %arg2[%c0_1, %c0_2] : memref<115x64xf32, #tpu.memory_space<vmem>>, vector<115x64xf32>
    %cst = arith.constant dense<0.000000e+00> : vector<8x64xf32>
    %2 = tpu.matmul %0, %1, %cst {dimension_numbers = #tpu.dot_dimension_numbers<[1], [0], [0], [1], [0, 0, 1, 1], [], []>} : vector<8x115xf32>, vector<115x64xf32>, vector<8x64xf32> -> vector<8x64xf32>
    %c0_3 = arith.constant 0 : index
    %c0_4 = arith.constant 0 : index
    %3 = vector.load %arg3[%c0_3, %c0_4] : memref<1x64xf32, #tpu.memory_space<vmem>>, vector<1x64xf32>
    %4 = vector.broadcast %3 : vector<1x64xf32> to vector<8x64xf32>
    %5 = arith.addf %2, %4 : vector<8x64xf32>
    %cst_5 = arith.constant 0.000000e+00 : f32
    %6 = vector.broadcast %cst_5 : f32 to vector<8x64xf32>
    %7 = arith.maximumf %5, %6 : vector<8x64xf32>
    %c0_6 = arith.constant 0 : index
    %c0_7 = arith.constant 0 : index
    %8 = vector.load %arg4[%c0_6, %c0_7] : memref<64x19xf32, #tpu.memory_space<vmem>>, vector<64x19xf32>
    %cst_8 = arith.constant dense<0.000000e+00> : vector<8x19xf32>
    %9 = tpu.matmul %7, %8, %cst_8 {dimension_numbers = #tpu.dot_dimension_numbers<[1], [0], [0], [1], [0, 0, 1, 1], [], []>} : vector<8x64xf32>, vector<64x19xf32>, vector<8x19xf32> -> vector<8x19xf32>
    %c0_9 = arith.constant 0 : index
    %c0_10 = arith.constant 0 : index
    %10 = vector.load %arg5[%c0_9, %c0_10] : memref<1x19xf32, #tpu.memory_space<vmem>>, vector<1x19xf32>
    %11 = vector.broadcast %10 : vector<1x19xf32> to vector<8x19xf32>
    %12 = arith.addf %9, %11 : vector<8x19xf32>
    %cst_11 = arith.constant dense<0xFF800000> : vector<8xf32>
    %13 = vector.multi_reduction <maximumf>, %12, %cst_11 [1] : vector<8x19xf32> to vector<8xf32>
    %14 = vector.shape_cast %13 : vector<8xf32> to vector<8x1xf32>
    %15 = vector.broadcast %14 : vector<8x1xf32> to vector<8x19xf32>
    %16 = arith.subf %12, %15 : vector<8x19xf32>
    %17 = math.exp %16 : vector<8x19xf32>
    %cst_12 = arith.constant dense<0.000000e+00> : vector<8xf32>
    %18 = vector.multi_reduction <add>, %17, %cst_12 [1] : vector<8x19xf32> to vector<8xf32>
    %19 = vector.shape_cast %18 : vector<8xf32> to vector<8x1xf32>
    %20 = vector.broadcast %19 : vector<8x1xf32> to vector<8x19xf32>
    %21 = arith.divf %17, %20 : vector<8x19xf32>
    %c0_13 = arith.constant 0 : index
    %c0_14 = arith.constant 0 : index
    %22 = vector.load %arg6[%c0_13, %c0_14] : memref<8x19xf32, #tpu.memory_space<vmem>>, vector<8x19xf32>
    tpu.vector_store %arg6[%c0_13, %c0_14], %21 {strides = array<i32>} : memref<8x19xf32, #tpu.memory_space<vmem>>, vector<8x19xf32>,
    return
  }
  func.func @transform_0(%arg0: i32) -> (i32, i32) {
    %c0_i32 = arith.constant 0 : i32
    %c0_i32_0 = arith.constant 0 : i32
    return %arg0, %c0_i32 : i32, i32
  }
  func.func @transform_1(%arg0: i32) -> (i32, i32) {
    %c0_i32 = arith.constant 0 : i32
    %c0_i32_0 = arith.constant 0 : i32
    %c0_i32_1 = arith.constant 0 : i32
    return %c0_i32, %c0_i32_0 : i32, i32
  }
  func.func @transform_2(%arg0: i32) -> (i32, i32) {
    %c0_i32 = arith.constant 0 : i32
    %c0_i32_0 = arith.constant 0 : i32
    %c0_i32_1 = arith.constant 0 : i32
    return %c0_i32, %c0_i32_0 : i32, i32
  }
  func.func @transform_3(%arg0: i32) -> (i32, i32) {
    %c0_i32 = arith.constant 0 : i32
    %c0_i32_0 = arith.constant 0 : i32
    %c0_i32_1 = arith.constant 0 : i32
    return %c0_i32, %c0_i32_0 : i32, i32
  }
  func.func @transform_4(%arg0: i32) -> (i32, i32) {
    %c0_i32 = arith.constant 0 : i32
    %c0_i32_0 = arith.constant 0 : i32
    %c0_i32_1 = arith.constant 0 : i32
    return %c0_i32, %c0_i32_0 : i32, i32
  }
  func.func @transform_5(%arg0: i32) -> (i32, i32) {
    %c0_i32 = arith.constant 0 : i32
    %c0_i32_0 = arith.constant 0 : i32
    return %arg0, %c0_i32 : i32, i32
  }
}

</mosaic_0001>

<llo_original>
// kernel: actor_forward.1
$region0: #{actor_forward.1}
  #allocation0 [shape = 'u32[]', space=smem, size = 0x4, offset = 0x4, fixed_abs, tag = 'smem constant byte address 0x4 - core index']
  #allocation1 [shape = 'u32[144,128]{1,0:T(1,128)}', space=vmem, size = 0x12000, scoped, tag = 'internal scratch']
  %s0 = inlined_call_operand.vmem [shape: f32[8,115], index: 0, kind: input, shape index: {}]
  %s1 = inlined_call_operand.vmem [shape: f32[115,64], index: 1, kind: input, shape index: {}]
  %s2 = inlined_call_operand.vmem [shape: f32[1,64], index: 2, kind: input, shape index: {}]
  %s3 = inlined_call_operand.vmem [shape: f32[64,19], index: 3, kind: input, shape index: {}]
  %s4 = inlined_call_operand.vmem [shape: f32[1,19], index: 4, kind: input, shape index: {}]
  %s5 = inlined_call_operand.hbm [shape: f32[8,19], index: 5, kind: output, shape index: {}]
  %s6 = sld [smem:[#allocation0]]
  $region30: #{actor_forward.1} parent=0
    _
  %s8 = ssub.s32 1, %s6
  %s9 = scalar_select 0, %s8, %s6
  $region1: #{actor_forward.1} parent=0
    #allocation2 [shape = 'u8[4096]{0}', space=vmem, size = 0x1000, scoped, tag = 'output window, operand 0, single buffered']
    #allocation3 [shape = 's32[1]{0}', space=sflag, size = 0x4, scoped, tag = 'scoped memory for actor_forward.1']
    %10 = vsyncpa [#allocation3], 0
    // Predicated region
    $region2: #{actor_forward.1} parent=1 // pred_check
      _
    $region3: #{actor_forward.1} parent=1 // pred_check_branch
      %12 = sbr.rel (0) target = $region5
    $region4: #{actor_forward.1} parent=1 // pred_region
      _
    $region5: #{actor_forward.1} parent=1 // pred_fallthru
      _
    // Predicated region
    $region6: #{actor_forward.1} parent=1 // pred_check
      _
    $region7: #{actor_forward.1} parent=1 // pred_check_branch
      %14 = sbr.rel (0) target = $region9
    $region8: #{actor_forward.1} parent=1 // pred_region
      _
    $region9: #{actor_forward.1} parent=1 // pred_fallthru
      _
    // Predicated region
    $region10: #{actor_forward.1} parent=1 // pred_check
      _
    $region11: #{actor_forward.1} parent=1 // pred_check_branch
      %16 = sbr.rel (0) target = $region13
    $region12: #{actor_forward.1} parent=1 // pred_region
      _
    $region13: #{actor_forward.1} parent=1 // pred_fallthru
      _
    // Predicated region
    $region14: #{actor_forward.1} parent=1 // pred_check
      _
    $region15: #{actor_forward.1} parent=1 // pred_check_branch
      %18 = sbr.rel (0) target = $region17
    $region16: #{actor_forward.1} parent=1 // pred_region
      _
    $region17: #{actor_forward.1} parent=1 // pred_fallthru
      _
    // Predicated region
    $region18: #{actor_forward.1} parent=1 // pred_check
      _
    $region19: #{actor_forward.1} parent=1 // pred_check_branch
      %20 = sbr.rel (0) target = $region21
    $region20: #{actor_forward.1} parent=1 // pred_region
      _
    $region21: #{actor_forward.1} parent=1 // pred_fallthru
      _
    %v21 = vld [vmem:[%s0] sm:$0xff]
    %v22 = vld [vmem:[%s1] sm:$0xff]
    %v23 = vld [vmem:[%s1 + $0x8] sm:$0xff]
    %v24 = vld [vmem:[%s1 + $0x10] sm:$0xff]
    %v25 = vld [vmem:[%s1 + $0x18] sm:$0xff]
    %v26 = vld [vmem:[%s1 + $0x20] sm:$0xff]
    %v27 = vld [vmem:[%s1 + $0x28] sm:$0xff]
    %v28 = vld [vmem:[%s1 + $0x30] sm:$0xff]
    %v29 = vld [vmem:[%s1 + $0x38] sm:$0xff]
    %v30 = vld [vmem:[%s1 + $0x40] sm:$0xff]
    %v31 = vld [vmem:[%s1 + $0x48] sm:$0xff]
    %v32 = vld [vmem:[%s1 + $0x50] sm:$0xff]
    %v33 = vld [vmem:[%s1 + $0x58] sm:$0xff]
    %v34 = vld [vmem:[%s1 + $0x60] sm:$0xff]
    %v35 = vld [vmem:[%s1 + $0x68] sm:$0xff]
    %v36 = vld [vmem:[%s1 + $0x70] sm:$0x7]
    %v37 = vld [vmem:[%s2] sm:$0x1]
    %v39 = vlaneseq
    %v40 = vshrl.u32 %v39, 7
    %v41 = vsub.s32 0, %v40
    %v42 = vrot.slane %v37, %v41
    %vm44 = vcmask 941056
    %v46 = vsel %vm44, %v21, 0
    %vm48 = vcmask 1042432
    %v50 = vsel %vm48, %v36, 0
    %52 = vmatprep.subr.mxu0 0.0
    %53 = vmatpush1.msra.mxu0 %v22
    %54 = vmatprep.subr.mxu0 0.0
    %55 = vmatpush1.msra.mxu0 %v23
    %56 = vmatprep.subr.mxu0 0.0
    %57 = vmatpush1.msra.mxu0 %v24
    %58 = vmatprep.subr.mxu0 0.0
    %59 = vmatpush1.msra.mxu0 %v25
    %60 = vmatprep.subr.mxu0 0.0
    %61 = vmatpush1.msra.mxu0 %v26
    %62 = vmatprep.subr.mxu0 0.0
    %63 = vmatpush1.msra.mxu0 %v27
    %64 = vmatprep.subr.mxu0 0.0
    %65 = vmatpush1.msra.mxu0 %v28
    %66 = vmatprep.subr.mxu0 0.0
    %67 = vmatpush1.msra.mxu0 %v29
    %68 = vmatprep.subr.mxu0 0.0
    %69 = vmatpush1.msra.mxu0 %v30
    %70 = vmatprep.subr.mxu0 0.0
    %71 = vmatpush1.msra.mxu0 %v31
    %72 = vmatprep.subr.mxu0 0.0
    %73 = vmatpush1.msra.mxu0 %v32
    %74 = vmatprep.subr.mxu0 0.0
    %75 = vmatpush1.msra.mxu0 %v33
    %76 = vmatprep.subr.mxu0 0.0
    %77 = vmatpush1.msra.mxu0 %v34
    %78 = vmatprep.subr.mxu0 0.0
    %79 = vmatpush1.msra.mxu0 %v35
    %80 = vmatprep.subr.mxu0 0.0
    %81 = vmatpush1.msra.mxu0 %v50
    %82 = vmatprep.subr.mxu0 0.0
    %83 = vmatpush1.msra.mxu0 0.0
    %84 = vmatprep.subr.mxu0 0.0
    %85 = vmatpush1.msra.mxu0 0.0
    %86 = vmatprep.subr.mxu0 0.0
    %87 = vmatpush1.msra.mxu0 0.0
    %88 = vmatprep.subr.mxu0 0.0
    %89 = vmatpush1.msra.mxu0 0.0
    %90 = vmatprep.subr.mxu0 0.0
    %91 = vmatpush1.msra.mxu0 0.0
    %92 = vmatprep.subr.mxu0 0.0
    %93 = vmatpush1.msra.mxu0 0.0
    %94 = vmatprep.subr.mxu0 0.0
    %95 = vmatpush1.msra.mxu0 0.0
    %96 = vmatprep.subr.mxu0 0.0
    %97 = vmatpush1.msra.mxu0 0.0
    %98 = vmatprep.subr.mxu0 0.0
    %99 = vmatpush1.msra.mxu0 0.0
    %100 = vmatprep.subr.mxu0 0.0
    %101 = vmatpush1.msra.mxu0 0.0
    %102 = vmatprep.subr.mxu0 0.0
    %103 = vmatpush1.msra.mxu0 0.0
    %104 = vmatprep.subr.mxu0 0.0
    %105 = vmatpush1.msra.mxu0 0.0
    %106 = vmatprep.subr.mxu0 0.0
    %107 = vmatpush1.msra.mxu0 0.0
    %108 = vmatprep.subr.mxu0 0.0
    %109 = vmatpush1.msra.mxu0 0.0
    %110 = vmatprep.subr.mxu0 0.0
    %111 = vmatpush1.msra.mxu0 0.0
    %112 = vmatprep.subr.mxu0 0.0
    %113 = vmatpush1.msra.mxu0 0.0
    %114 = vmatprep.subr.mxu0 0.0
    %115 = vmatpush1.msra.mxu0 0.0
    %116 = vmatprep.mubr.f32.mxu0 0.0
    %117 = vmatmul.mubr.f32.gmra.mrb[0].mxu0 %v46
    %v118 = vpop.f32.mrb[0].mxu0
    %v119 = vadd.f32 %v42, %v118
    %v120 = vpop.f32.mrb[0].mxu0
    %121 = vdwg.mxu0
    %v122 = vmax.f32 %v119, 0.0
    %v123 = vld [vmem:[%s3] sm:$0xff]
    %v124 = vld [vmem:[%s3 + $0x8] sm:$0xff]
    %v125 = vld [vmem:[%s3 + $0x10] sm:$0xff]
    %v126 = vld [vmem:[%s3 + $0x18] sm:$0xff]
    %v127 = vld [vmem:[%s3 + $0x20] sm:$0xff]
    %v128 = vld [vmem:[%s3 + $0x28] sm:$0xff]
    %v129 = vld [vmem:[%s3 + $0x30] sm:$0xff]
    %v130 = vld [vmem:[%s3 + $0x38] sm:$0xff]
    %v131 = vld [vmem:[%s4] sm:$0x1]
    %v133 = vlaneseq
    %v134 = vshrl.u32 %v133, 7
    %v135 = vsub.s32 0, %v134
    %v136 = vrot.slane %v131, %v135
    %vm138 = vcmask 523264
    %v140 = vsel %vm138, %v122, 0
    %142 = vmatprep.subr.mxu0 0.0
    %143 = vmatpush1.msra.mxu0 %v123
    %144 = vmatprep.subr.mxu0 0.0
    %145 = vmatpush1.msra.mxu0 %v124
    %146 = vmatprep.subr.mxu0 0.0
    %147 = vmatpush1.msra.mxu0 %v125
    %148 = vmatprep.subr.mxu0 0.0
    %149 = vmatpush1.msra.mxu0 %v126
    %150 = vmatprep.subr.mxu0 0.0
    %151 = vmatpush1.msra.mxu0 %v127
    %152 = vmatprep.subr.mxu0 0.0
    %153 = vmatpush1.msra.mxu0 %v128
    %154 = vmatprep.subr.mxu0 0.0
    %155 = vmatpush1.msra.mxu0 %v129
    %156 = vmatprep.subr.mxu0 0.0
    %157 = vmatpush1.msra.mxu0 %v130
    %158 = vmatprep.subr.mxu0 0.0
    %159 = vmatpush1.msra.mxu0 0.0
    %160 = vmatprep.subr.mxu0 0.0
    %161 = vmatpush1.msra.mxu0 0.0
    %162 = vmatprep.subr.mxu0 0.0
    %163 = vmatpush1.msra.mxu0 0.0
    %164 = vmatprep.subr.mxu0 0.0
    %165 = vmatpush1.msra.mxu0 0.0
    %166 = vmatprep.subr.mxu0 0.0
    %167 = vmatpush1.msra.mxu0 0.0
    %168 = vmatprep.subr.mxu0 0.0
    %169 = vmatpush1.msra.mxu0 0.0
    %170 = vmatprep.subr.mxu0 0.0
    %171 = vmatpush1.msra.mxu0 0.0
    %172 = vmatprep.subr.mxu0 0.0
    %173 = vmatpush1.msra.mxu0 0.0
    %174 = vmatprep.subr.mxu0 0.0
    %175 = vmatpush1.msra.mxu0 0.0
    %176 = vmatprep.subr.mxu0 0.0
    %177 = vmatpush1.msra.mxu0 0.0
    %178 = vmatprep.subr.mxu0 0.0
    %179 = vmatpush1.msra.mxu0 0.0
    %180 = vmatprep.subr.mxu0 0.0
    %181 = vmatpush1.msra.mxu0 0.0
    %182 = vmatprep.subr.mxu0 0.0
    %183 = vmatpush1.msra.mxu0 0.0
    %184 = vmatprep.subr.mxu0 0.0
    %185 = vmatpush1.msra.mxu0 0.0
    %186 = vmatprep.subr.mxu0 0.0
    %187 = vmatpush1.msra.mxu0 0.0
    %188 = vmatprep.subr.mxu0 0.0
    %189 = vmatpush1.msra.mxu0 0.0
    %190 = vmatprep.subr.mxu0 0.0
    %191 = vmatpush1.msra.mxu0 0.0
    %192 = vmatprep.subr.mxu0 0.0
    %193 = vmatpush1.msra.mxu0 0.0
    %194 = vmatprep.subr.mxu0 0.0
    %195 = vmatpush1.msra.mxu0 0.0
    %196 = vmatprep.subr.mxu0 0.0
    %197 = vmatpush1.msra.mxu0 0.0
    %198 = vmatprep.subr.mxu0 0.0
    %199 = vmatpush1.msra.mxu0 0.0
    %200 = vmatprep.subr.mxu0 0.0
    %201 = vmatpush1.msra.mxu0 0.0
    %202 = vmatprep.subr.mxu0 0.0
    %203 = vmatpush1.msra.mxu0 0.0
    %204 = vmatprep.subr.mxu0 0.0
    %205 = vmatpush1.msra.mxu0 0.0
    %206 = vmatprep.mubr.f32.mxu0 0.0
    %207 = vmatmul.mubr.f32.gmra.mrb[0].mxu0 %v140
    %v208 = vpop.f32.mrb[0].mxu0
    %v209 = vadd.f32 %v136, %v208
    %v210 = vpop.f32.mrb[0].mxu0
    %211 = vdwg.mxu0
    %vm212 = vcmask 154624
    %v213 = vsel %vm212, %v209, -inf
    %214 = vmax.xlane.f32.xlu0 %v213
    %v215 = vpop.xlane.xlu0 %214
    %v216 = vsub.f32 %v209, %v215
    %v217 = vmul.f32 %v216, 1.442695
    %v218 = vpow.pop %v217
    %v219 = vsel %vm212, %v218, 0.0
    %220 = vadd.xlane.f32.xlu0 %v219
    %v221 = vpop.xlane.xlu0 %220
    %v222 = vrcp.pop %v221
    %v223 = vmul.f32 %v218, %v222
    %224 = vst.msk [vmem:[#allocation2] sm:$0xff] %vm212, %v223
    // Predicated region
    $region22: #{actor_forward.1} parent=1 // pred_check
      _
    $region23: #{actor_forward.1} parent=1 // pred_check_branch
      %226 = sbr.rel (0) target = $region25
    $region24: #{actor_forward.1} parent=1 // pred_region
      %s228 = ssub.s32 128, 128
      %229 = vsyncadd [#allocation3], %s228
      %s231 = sshll.u32 [#allocation2], 4
      %s232 = int_to_ptr.vmem [resolvable:$true] %s231
      %234 = dma.vmem_to_hbm [thread:$0]  %s232, 128, %s5, [#allocation3]
    $region25: #{actor_forward.1} parent=1 // pred_fallthru
      _
    // Predicated region
    $region26: #{actor_forward.1} parent=1 // pred_check
      _
    $region27: #{actor_forward.1} parent=1 // pred_check_branch
      %236 = sbr.rel (0) target = $region29
    $region28: #{actor_forward.1} parent=1 // pred_region
      %237 = dma.done [#allocation3], 128
    $region29: #{actor_forward.1} parent=1 // pred_fallthru
      _
    %238 = vsyncpa [#allocation3], 1

</llo_original>
